<compile_context>
chip_gen: v5e
topology: v5e:2x2
jax: 0.10.0
libtpu: 0.0.40
codegen_flags: <defaults>
</compile_context>

<pallas_src>
import jax
import jax.numpy as jnp
from jax.experimental import pallas as pl
from jax.experimental.pallas import tpu as pltpu


def _round_up(x, m):
    return ((x + m - 1) // m) * m


def token_embeddings_kernel(ids_ref, fused_ref, b1_ref, w2_ref, b2_ref,
                            w3_ref, b3_ref, out_ref, h_ref):
    j = pl.program_id(1)

    # Gather + layer1 + layer2 only once per token tile (at vocab tile 0);
    # the (TILE_N, hidden) result persists in VMEM scratch across the vocab axis.
    @pl.when(j == 0)
    def _():
        tile_n = ids_ref.shape[0]
        vocab = fused_ref.shape[0]
        ids = ids_ref[...]                                        # (TILE_N, 1) int32
        col = jax.lax.broadcasted_iota(jnp.int32, (tile_n, vocab), 1)
        one_hot = (col == ids).astype(fused_ref.dtype)            # (TILE_N, V)
        # TODO(synk): for large vocab (>~2K) replace the one-hot matmul with a
        # scalar-prefetch row gather (pl.Element BlockSpec) to avoid the
        # (TILE_N, V) intermediate.
        h = jnp.dot(one_hot, fused_ref[...],
                    preferred_element_type=jnp.float32)           # emb @ w1
        h = jnp.maximum(h + b1_ref[...], 0.0)
        h = jnp.dot(h.astype(w2_ref.dtype), w2_ref[...],
                    preferred_element_type=jnp.float32)
        h_ref[...] = jnp.maximum(h + b2_ref[...], 0.0)

    # layer3 for this vocab tile: lane-dense (TILE_N, TILE_V) output block.
    logits = jnp.dot(h_ref[...].astype(w3_ref.dtype), w3_ref[...],
                     preferred_element_type=jnp.float32) + b3_ref[...]
    out_ref[...] = logits.astype(out_ref.dtype)


def token_embeddings_forward(context, table, w1, b1, w2, b2, w3, b3,
                             *, compute_dtype=jnp.bfloat16):
    """context: int (batch, seq). Returns (batch, seq, vocab) float32 logits."""
    batch, seq = context.shape
    vocab, _ = table.shape
    hidden = w1.shape[1]
    n = batch * seq

    # ---- Tiling -------------------------------------------------------------
    # Token tile: up to 256 rows (fills the v6e/v7x 256-wide MXU; v5e iterates
    # it 128-wide). Vocab tile: multiple of 128 lanes, capped at 512 so the
    # per-tile VMEM footprint stays well inside the v7x scoped budget.
    tile_n = min(256, _round_up(n, 8))
    n_pad = _round_up(n, tile_n)
    v_pad = _round_up(vocab, 128)
    if v_pad <= 512:
        tile_v = v_pad
    elif v_pad % 512 == 0:
        tile_v = 512
    elif v_pad % 256 == 0:
        tile_v = 256
    else:
        tile_v = 128
    grid = (n_pad // tile_n, v_pad // tile_v)

    # ---- Operand prep (plain XLA, once per call) ----------------------------
    # Fold the embedding table into layer 1: one_hot @ (table @ w1) + b1.
    fused = (table.astype(jnp.float32) @ w1.astype(jnp.float32)).astype(compute_dtype)
    w2c = w2.astype(compute_dtype)
    w3c = jnp.pad(w3, ((0, 0), (0, v_pad - vocab))).astype(compute_dtype)
    b1r = b1.reshape(1, hidden).astype(jnp.float32)
    b2r = b2.reshape(1, hidden).astype(jnp.float32)
    b3r = jnp.pad(b3, (0, v_pad - vocab)).reshape(1, v_pad).astype(jnp.float32)

    ids = context.reshape(n).astype(jnp.int32)
    ids = jnp.pad(ids, (0, n_pad - n)).reshape(n_pad, 1)

    out = pl.pallas_call(
        token_embeddings_kernel,
        out_shape=jax.ShapeDtypeStruct((n_pad, v_pad), jnp.float32),
        grid_spec=pltpu.PrefetchScalarGridSpec(
            num_scalar_prefetch=0,
            grid=grid,
            in_specs=[
                pl.BlockSpec((tile_n, 1), lambda i, j: (i, 0)),       # token ids (streamed)
                pl.BlockSpec((vocab, hidden), lambda i, j: (0, 0)),   # table @ w1 (resident)
                pl.BlockSpec((1, hidden), lambda i, j: (0, 0)),       # b1 (resident)
                pl.BlockSpec((hidden, hidden), lambda i, j: (0, 0)),  # w2 (resident)
                pl.BlockSpec((1, hidden), lambda i, j: (0, 0)),       # b2 (resident)
                pl.BlockSpec((hidden, tile_v), lambda i, j: (0, j)),  # w3 vocab tile
                pl.BlockSpec((1, tile_v), lambda i, j: (0, j)),       # b3 vocab tile
            ],
            out_specs=pl.BlockSpec((tile_n, tile_v), lambda i, j: (i, j)),
            scratch_shapes=[pltpu.VMEM((tile_n, hidden), jnp.float32)],
        ),
        compiler_params=pltpu.CompilerParams(
            dimension_semantics=("parallel", "arbitrary"),
        ),
    )(ids, fused, b1r, w2c, b2r, w3c, b3r)

    return out[:n, :vocab].reshape(batch, seq, vocab)


def init_params(key, vocab_size, embedding_dim, hidden=256):
    ks = jax.random.split(key, 7)
    # nn.Embedding: N(0, 1) init
    table = jax.random.normal(ks[0], (vocab_size, embedding_dim), jnp.float32)

    # nn.Linear-style uniform init; weights stored transposed (in, out).
    def linear(kw, kb, fan_in, fan_out):
        bound = 1.0 / jnp.sqrt(fan_in)
        w = jax.random.uniform(kw, (fan_in, fan_out), jnp.float32, -bound, bound)
        b = jax.random.uniform(kb, (fan_out,), jnp.float32, -bound, bound)
        return w, b

    w1, b1 = linear(ks[1], ks[2], embedding_dim, hidden)
    w2, b2 = linear(ks[3], ks[4], hidden, hidden)
    w3, b3 = linear(ks[5], ks[6], hidden, vocab_size)
    return table, w1, b1, w2, b2, w3, b3


def reference_forward(context, table, w1, b1, w2, b2, w3, b3):
    emb = table[context]                        # (B, S, D)
    h = jnp.maximum(emb @ w1 + b1, 0.0)
    h = jnp.maximum(h @ w2 + b2, 0.0)
    return h @ w3 + b3


if __name__ == "__main__":
    vocab_size = 64
    embedding_dim = 32
    batch, seq = 2, 8

    key = jax.random.PRNGKey(0)
    k_params, k_ids = jax.random.split(key)
    params = init_params(k_params, vocab_size, embedding_dim)
    context = jax.random.randint(k_ids, (batch, seq), 0, vocab_size, dtype=jnp.int32)

    ref = reference_forward(context, *params)

    # f32 compute path: tight check against the PyTorch-equivalent reference.
    out_f32 = jax.block_until_ready(
        token_embeddings_forward(context, *params, compute_dtype=jnp.float32))
    assert out_f32.shape == (batch, seq, vocab_size)
    assert jnp.allclose(out_f32, ref, atol=1e-3, rtol=1e-3)

    # bf16 matmul path (default, MXU-native): loose check for bf16 rounding.
    out_bf16 = jax.block_until_ready(token_embeddings_forward(context, *params))
    assert out_bf16.shape == (batch, seq, vocab_size)
    assert jnp.allclose(out_bf16, ref, atol=5e-2, rtol=5e-2)

    print("KERNEL_OK")
</pallas_src>

<mosaic_0001>
module attributes {stable_mosaic.version = 11 : i64} {
  func.func @token_embeddings_kernel(%arg0: i32, %arg1: i32, %arg2: memref<16x1xi32, #tpu.memory_space<vmem>>, %arg3: memref<64x256xf32, #tpu.memory_space<vmem>>, %arg4: memref<1x256xf32, #tpu.memory_space<vmem>>, %arg5: memref<256x256xf32, #tpu.memory_space<vmem>>, %arg6: memref<1x256xf32, #tpu.memory_space<vmem>>, %arg7: memref<256x128xf32, #tpu.memory_space<vmem>>, %arg8: memref<1x128xf32, #tpu.memory_space<vmem>>, %arg9: memref<16x128xf32, #tpu.memory_space<vmem>>, %arg10: memref<16x256xf32, #tpu.memory_space<vmem>>) attributes {dimension_semantics = [#tpu.dimension_semantics<parallel>, #tpu.dimension_semantics<arbitrary>], iteration_bounds = array<i64: 1, 1>, scalar_prefetch = 0 : i64, scratch_operands = 1 : i64, tpu.core_type = #tpu.core_type<tc>, window_params = [{transform_indices = @transform_0, window_bounds = array<i64: 16, 1>}, {pipeline_mode = #tpu.pipeline_mode<synchronous>, transform_indices = @transform_1, window_bounds = array<i64: 64, 256>}, {pipeline_mode = #tpu.pipeline_mode<synchronous>, transform_indices = @transform_2, window_bounds = array<i64: 1, 256>}, {pipeline_mode = #tpu.pipeline_mode<synchronous>, transform_indices = @transform_3, window_bounds = array<i64: 256, 256>}, {pipeline_mode = #tpu.pipeline_mode<synchronous>, transform_indices = @transform_4, window_bounds = array<i64: 1, 256>}, {transform_indices = @transform_5, window_bounds = array<i64: 256, 128>}, {transform_indices = @transform_6, window_bounds = array<i64: 1, 128>}, {transform_indices = @transform_7, window_bounds = array<i64: 16, 128>}]} {
    %c0_i32 = arith.constant 0 : i32
    %0 = arith.cmpi eq, %arg1, %c0_i32 : i32
    %1 = arith.extui %0 : i1 to i32
    %c0_i32_0 = arith.constant 0 : i32
    %2 = arith.cmpi ne, %1, %c0_i32_0 : i32
    scf.if %2 {
      %c0_8 = arith.constant 0 : index
      %c0_9 = arith.constant 0 : index
      %10 = vector.load %arg2[%c0_8, %c0_9] : memref<16x1xi32, #tpu.memory_space<vmem>>, vector<16x1xi32>
      %11 = tpu.iota {dimensions = array<i32: 1>} : vector<16x64xi32>
      %12 = vector.broadcast %10 : vector<16x1xi32> to vector<16x64xi32>
      %13 = arith.cmpi eq, %11, %12 : vector<16x64xi32>
      %14 = arith.extui %13 : vector<16x64xi1> to vector<16x64xi32>
      %15 = arith.sitofp %14 : vector<16x64xi32> to vector<16x64xf32>
      %c0_10 = arith.constant 0 : index
      %c0_11 = arith.constant 0 : index
      %16 = vector.load %arg3[%c0_10, %c0_11] : memref<64x256xf32, #tpu.memory_space<vmem>>, vector<64x256xf32>
      %cst_12 = arith.constant dense<0.000000e+00> : vector<16x256xf32>
      %17 = tpu.matmul %15, %16, %cst_12 {dimension_numbers = #tpu.dot_dimension_numbers<[1], [0], [0], [1], [0, 0, 1, 1], [], []>} : vector<16x64xf32>, vector<64x256xf32>, vector<16x256xf32> -> vector<16x256xf32>
      %c0_13 = arith.constant 0 : index
      %c0_14 = arith.constant 0 : index
      %18 = vector.load %arg4[%c0_13, %c0_14] : memref<1x256xf32, #tpu.memory_space<vmem>>, vector<1x256xf32>
      %19 = vector.broadcast %18 : vector<1x256xf32> to vector<16x256xf32>
      %20 = arith.addf %17, %19 : vector<16x256xf32>
      %cst_15 = arith.constant 0.000000e+00 : f32
      %21 = vector.broadcast %cst_15 : f32 to vector<16x256xf32>
      %22 = arith.maximumf %20, %21 : vector<16x256xf32>
      %c0_16 = arith.constant 0 : index
      %c0_17 = arith.constant 0 : index
      %23 = vector.load %arg5[%c0_16, %c0_17] : memref<256x256xf32, #tpu.memory_space<vmem>>, vector<256x256xf32>
      %cst_18 = arith.constant dense<0.000000e+00> : vector<16x256xf32>
      %24 = tpu.matmul %22, %23, %cst_18 {dimension_numbers = #tpu.dot_dimension_numbers<[1], [0], [0], [1], [0, 0, 1, 1], [], []>} : vector<16x256xf32>, vector<256x256xf32>, vector<16x256xf32> -> vector<16x256xf32>
      %c0_19 = arith.constant 0 : index
      %c0_20 = arith.constant 0 : index
      %25 = vector.load %arg6[%c0_19, %c0_20] : memref<1x256xf32, #tpu.memory_space<vmem>>, vector<1x256xf32>
      %26 = vector.broadcast %25 : vector<1x256xf32> to vector<16x256xf32>
      %27 = arith.addf %24, %26 : vector<16x256xf32>
      %cst_21 = arith.constant 0.000000e+00 : f32
      %28 = vector.broadcast %cst_21 : f32 to vector<16x256xf32>
      %29 = arith.maximumf %27, %28 : vector<16x256xf32>
      %c0_22 = arith.constant 0 : index
      %c0_23 = arith.constant 0 : index
      %30 = vector.load %arg10[%c0_22, %c0_23] : memref<16x256xf32, #tpu.memory_space<vmem>>, vector<16x256xf32>
      tpu.vector_store %arg10[%c0_22, %c0_23], %29 {strides = array<i32>} : memref<16x256xf32, #tpu.memory_space<vmem>>, vector<16x256xf32>,
    } else {
    }
    %c0 = arith.constant 0 : index
    %c0_1 = arith.constant 0 : index
    %3 = vector.load %arg10[%c0, %c0_1] : memref<16x256xf32, #tpu.memory_space<vmem>>, vector<16x256xf32>
    %c0_2 = arith.constant 0 : index
    %c0_3 = arith.constant 0 : index
    %4 = vector.load %arg7[%c0_2, %c0_3] : memref<256x128xf32, #tpu.memory_space<vmem>>, vector<256x128xf32>
    %cst = arith.constant dense<0.000000e+00> : vector<16x128xf32>
    %5 = tpu.matmul %3, %4, %cst {dimension_numbers = #tpu.dot_dimension_numbers<[1], [0], [0], [1], [0, 0, 1, 1], [], []>} : vector<16x256xf32>, vector<256x128xf32>, vector<16x128xf32> -> vector<16x128xf32>
    %c0_4 = arith.constant 0 : index
    %c0_5 = arith.constant 0 : index
    %6 = vector.load %arg8[%c0_4, %c0_5] : memref<1x128xf32, #tpu.memory_space<vmem>>, vector<1x128xf32>
    %7 = vector.broadcast %6 : vector<1x128xf32> to vector<16x128xf32>
    %8 = arith.addf %5, %7 : vector<16x128xf32>
    %c0_6 = arith.constant 0 : index
    %c0_7 = arith.constant 0 : index
    %9 = vector.load %arg9[%c0_6, %c0_7] : memref<16x128xf32, #tpu.memory_space<vmem>>, vector<16x128xf32>
    tpu.vector_store %arg9[%c0_6, %c0_7], %8 {strides = array<i32>} : memref<16x128xf32, #tpu.memory_space<vmem>>, vector<16x128xf32>,
    return
  }
  func.func @transform_0(%arg0: i32, %arg1: i32) -> (i32, i32) {
    %c0_i32 = arith.constant 0 : i32
    %c0_i32_0 = arith.constant 0 : i32
    return %arg0, %c0_i32 : i32, i32
  }
  func.func @transform_1(%arg0: i32, %arg1: i32) -> (i32, i32) {
    %c0_i32 = arith.constant 0 : i32
    %c0_i32_0 = arith.constant 0 : i32
    %c0_i32_1 = arith.constant 0 : i32
    return %c0_i32, %c0_i32_0 : i32, i32
  }
  func.func @transform_2(%arg0: i32, %arg1: i32) -> (i32, i32) {
    %c0_i32 = arith.constant 0 : i32
    %c0_i32_0 = arith.constant 0 : i32
    %c0_i32_1 = arith.constant 0 : i32
    return %c0_i32, %c0_i32_0 : i32, i32
  }
  func.func @transform_3(%arg0: i32, %arg1: i32) -> (i32, i32) {
    %c0_i32 = arith.constant 0 : i32
    %c0_i32_0 = arith.constant 0 : i32
    %c0_i32_1 = arith.constant 0 : i32
    return %c0_i32, %c0_i32_0 : i32, i32
  }
  func.func @transform_4(%arg0: i32, %arg1: i32) -> (i32, i32) {
    %c0_i32 = arith.constant 0 : i32
    %c0_i32_0 = arith.constant 0 : i32
    %c0_i32_1 = arith.constant 0 : i32
    return %c0_i32, %c0_i32_0 : i32, i32
  }
  func.func @transform_5(%arg0: i32, %arg1: i32) -> (i32, i32) {
    %c0_i32 = arith.constant 0 : i32
    %c0_i32_0 = arith.constant 0 : i32
    return %c0_i32, %arg1 : i32, i32
  }
  func.func @transform_6(%arg0: i32, %arg1: i32) -> (i32, i32) {
    %c0_i32 = arith.constant 0 : i32
    %c0_i32_0 = arith.constant 0 : i32
    return %c0_i32, %arg1 : i32, i32
  }
  func.func @transform_7(%arg0: i32, %arg1: i32) -> (i32, i32) {
    %c0_i32 = arith.constant 0 : i32
    return %arg0, %arg1 : i32, i32
  }
}

</mosaic_0001>

<llo_original>
// kernel: tpu_custom_call.1
$region0: #{tpu_custom_call.1}
  #allocation0 [shape = 'u32[]', space=smem, size = 0x4, offset = 0x4, fixed_abs, tag = 'smem constant byte address 0x4 - core index']
  #allocation1 [shape = 'u32[72,128]{1,0:T(1,128)}', space=vmem, size = 0x9000, scoped, tag = 'internal scratch']
  #allocation2 [shape = 'f32[16,256]{1,0:T(8,128)}', space=vmem, size = 0x4000, scoped, tag = 'scratch operand']
  %s0 = inlined_call_operand.vmem [shape: s32[16,1], index: 0, kind: input, shape index: {}]
  %s1 = inlined_call_operand.hbm [shape: f32[64,256], index: 1, kind: input, shape index: {}]
  %s2 = inlined_call_operand.vmem [shape: f32[1,256], index: 2, kind: input, shape index: {}]
  %s3 = inlined_call_operand.hbm [shape: f32[256,256], index: 3, kind: input, shape index: {}]
  %s4 = inlined_call_operand.vmem [shape: f32[1,256], index: 4, kind: input, shape index: {}]
  %s5 = inlined_call_operand.hbm [shape: f32[256,128], index: 5, kind: input, shape index: {}]
  %s6 = inlined_call_operand.vmem [shape: f32[1,128], index: 6, kind: input, shape index: {}]
  %s7 = inlined_call_operand.hbm [shape: f32[16,128], index: 7, kind: output, shape index: {}]
  %s8 = sld [smem:[#allocation0]]
  $region54: #{tpu_custom_call.1} parent=0
    _
  %s10 = ssub.s32 1, %s8
  %s11 = scalar_select 0, %s10, %s8
  $region1: #{tpu_custom_call.1} parent=0
    #allocation3 [shape = 'u8[65536]{0}', space=vmem, size = 0x10000, scoped, tag = 'input window, operand 1, single buffered']
    #allocation4 [shape = 's32[1]{0}', space=sflag, size = 0x4, scoped, tag = 'scoped memory for tpu_custom_call.1']
    #allocation5 [shape = 's32[1]{0}', space=sflag, size = 0x4, scoped, tag = 'scoped memory for tpu_custom_call.1']
    #allocation6 [shape = 'u8[262144]{0}', space=vmem, size = 0x40000, scoped, tag = 'input window, operand 3, single buffered']
    #allocation7 [shape = 's32[1]{0}', space=sflag, size = 0x4, scoped, tag = 'scoped memory for tpu_custom_call.1']
    #allocation8 [shape = 'u8[131072]{0}', space=vmem, size = 0x20000, scoped, tag = 'input window, operand 5, single buffered']
    #allocation9 [shape = 'u8[8192]{0}', space=vmem, size = 0x2000, scoped, tag = 'output window, operand 0, single buffered']
    %12 = vsyncpa [#allocation4], 0
    %13 = vsyncpa [#allocation7], 0
    %14 = vsyncpa [#allocation5], 0
    // Predicated region
    $region2: #{tpu_custom_call.1} parent=1 // pred_check
      _
    $region3: #{tpu_custom_call.1} parent=1 // pred_check_branch
      %16 = sbr.rel (0) target = $region5
    $region4: #{tpu_custom_call.1} parent=1 // pred_region
      _
    $region5: #{tpu_custom_call.1} parent=1 // pred_fallthru
      _
    // Predicated region
    $region6: #{tpu_custom_call.1} parent=1 // pred_check
      _
    $region7: #{tpu_custom_call.1} parent=1 // pred_check_branch
      %18 = sbr.rel (0) target = $region9
    $region8: #{tpu_custom_call.1} parent=1 // pred_region
      %20 = vsyncadd [#allocation4], 0
      %s21 = sshll.u32 %s1, 4
      %s22 = int_to_ptr.hbm [resolvable:$true] %s21
      %s23 = sshll.u32 [#allocation3], 4
      %s24 = int_to_ptr.vmem [resolvable:$true] %s23
      %29 = dma.hbm_to_vmem [thread:$0]  %s22, 2048, %s24, [#allocation4], 256, 256, 16
    $region9: #{tpu_custom_call.1} parent=1 // pred_fallthru
      _
    // Predicated region
    $region10: #{tpu_custom_call.1} parent=1 // pred_check
      _
    $region11: #{tpu_custom_call.1} parent=1 // pred_check_branch
      %31 = sbr.rel (0) target = $region13
    $region12: #{tpu_custom_call.1} parent=1 // pred_region
      _
    $region13: #{tpu_custom_call.1} parent=1 // pred_fallthru
      _
    // Predicated region
    $region14: #{tpu_custom_call.1} parent=1 // pred_check
      _
    $region15: #{tpu_custom_call.1} parent=1 // pred_check_branch
      %33 = sbr.rel (0) target = $region17
    $region16: #{tpu_custom_call.1} parent=1 // pred_region
      %35 = vsyncadd [#allocation7], 0
      %s36 = sshll.u32 %s3, 4
      %s37 = int_to_ptr.hbm [resolvable:$true] %s36
      %s38 = sshll.u32 [#allocation6], 4
      %s39 = int_to_ptr.vmem [resolvable:$true] %s38
      %44 = dma.hbm_to_vmem [thread:$0]  %s37, 8192, %s39, [#allocation7], 256, 256, 16
    $region17: #{tpu_custom_call.1} parent=1 // pred_fallthru
      _
    // Predicated region
    $region18: #{tpu_custom_call.1} parent=1 // pred_check
      _
    $region19: #{tpu_custom_call.1} parent=1 // pred_check_branch
      %46 = sbr.rel (0) target = $region21
    $region20: #{tpu_custom_call.1} parent=1 // pred_region
      _
    $region21: #{tpu_custom_call.1} parent=1 // pred_fallthru
      _
    // Predicated region
    $region22: #{tpu_custom_call.1} parent=1 // pred_check
      _
    $region23: #{tpu_custom_call.1} parent=1 // pred_check_branch
      %48 = sbr.rel (0) target = $region25
    $region24: #{tpu_custom_call.1} parent=1 // pred_region
      %50 = vsyncadd [#allocation7], 0
      %s51 = sshll.u32 %s5, 4
      %s52 = int_to_ptr.hbm [resolvable:$true] %s51
      %s53 = sshll.u32 [#allocation8], 4
      %s54 = int_to_ptr.vmem [resolvable:$true] %s53
      %59 = dma.hbm_to_vmem [thread:$0]  %s52, 4096, %s54, [#allocation7], 128, 128, 8
    $region25: #{tpu_custom_call.1} parent=1 // pred_fallthru
      _
    // Predicated region
    $region26: #{tpu_custom_call.1} parent=1 // pred_check
      _
    $region27: #{tpu_custom_call.1} parent=1 // pred_check_branch
      %61 = sbr.rel (0) target = $region29
    $region28: #{tpu_custom_call.1} parent=1 // pred_region
      _
    $region29: #{tpu_custom_call.1} parent=1 // pred_fallthru
      _
    // Predicated region
    $region30: #{tpu_custom_call.1} parent=1 // pred_check
      _
    $region31: #{tpu_custom_call.1} parent=1 // pred_check_branch
      %63 = sbr.rel (0) target = $region33
    $region32: #{tpu_custom_call.1} parent=1 // pred_region
      %65 = dma.done [#allocation4], 2048
    $region33: #{tpu_custom_call.1} parent=1 // pred_fallthru
      _
    // Predicated region
    $region34: #{tpu_custom_call.1} parent=1 // pred_check
      _
    $region35: #{tpu_custom_call.1} parent=1 // pred_check_branch
      %67 = sbr.rel (0) target = $region37
    $region36: #{tpu_custom_call.1} parent=1 // pred_region
      %69 = dma.done [#allocation7], 8192
    $region37: #{tpu_custom_call.1} parent=1 // pred_fallthru
      _
    // Predicated region
    $region38: #{tpu_custom_call.1} parent=1 // pred_check
      _
    $region39: #{tpu_custom_call.1} parent=1 // pred_check_branch
      %71 = sbr.rel (0) target = $region41
    $region40: #{tpu_custom_call.1} parent=1 // pred_region
      %73 = dma.done [#allocation7], 4096
    $region41: #{tpu_custom_call.1} parent=1 // pred_fallthru
      _
    %p74 = scmp.eq.s32.totalorder 0, 0
    // Predicated region
    $region42: #{tpu_custom_call.1} parent=1 // pred_check
      %p75 = pneg %p74
    $region43: #{tpu_custom_call.1} parent=1 // pred_check_branch
      %77 = sbr.rel (%p75) target = $region45
    $region44: #{tpu_custom_call.1} parent=1 // pred_region
      %v78 = vld [vmem:[%s0] sm:$0xff]
      %v79 = vld [vmem:[%s0 + $0x8] sm:$0xff]
      %v80 = vlaneseq
      %v81 = vand.u32 %v80, 127
      %82 = vset.pattern.permute.xlu0 0
      %83 = vperm.xlu0 %82, %v78
      %v84 = vpop.permute.xlu0 %83
      %85 = vset.pattern.permute.xlu0 0
      %86 = vperm.xlu0 %85, %v79
      %v87 = vpop.permute.xlu0 %86
      %vm88 = vcmp.eq.s32.totalorder %v81, %v84
      %vm89 = vcmp.eq.s32.totalorder %v81, %v87
      %v90 = vsel %vm88, 1, 0
      %v91 = vsel %vm89, 1, 0
      %v92 = vcvt.s32.f32 %v90
      %v93 = vcvt.s32.f32 %v91
      %v94 = vld [vmem:[#allocation3] sm:$0xff]
      %v95 = vld [vmem:[#allocation3 + $0x8] sm:$0xff]
      %v96 = vld [vmem:[#allocation3 + $0x10] sm:$0xff]
      %v97 = vld [vmem:[#allocation3 + $0x18] sm:$0xff]
      %v98 = vld [vmem:[#allocation3 + $0x20] sm:$0xff]
      %v99 = vld [vmem:[#allocation3 + $0x28] sm:$0xff]
      %v100 = vld [vmem:[#allocation3 + $0x30] sm:$0xff]
      %v101 = vld [vmem:[#allocation3 + $0x38] sm:$0xff]
      %v102 = vld [vmem:[#allocation3 + $0x40] sm:$0xff]
      %v103 = vld [vmem:[#allocation3 + $0x48] sm:$0xff]
      %v104 = vld [vmem:[#allocation3 + $0x50] sm:$0xff]
      %v105 = vld [vmem:[#allocation3 + $0x58] sm:$0xff]
      %v106 = vld [vmem:[#allocation3 + $0x60] sm:$0xff]
      %v107 = vld [vmem:[#allocation3 + $0x68] sm:$0xff]
      %v108 = vld [vmem:[#allocation3 + $0x70] sm:$0xff]
      %v109 = vld [vmem:[#allocation3 + $0x78] sm:$0xff]
      %v110 = vld [vmem:[%s2] sm:$0x3]
      %v112 = vperm.slane %v110, 0
      %v113 = vperm.slane %v110, 1
      %vm116 = vcmask 523264
      %v118 = vsel %vm116, %v92, 0
      %v121 = vsel %vm116, %v93, 0
      %123 = vmatpush.msra.mxu0 0.0
      %124 = vmatpush.msra.mxu0 0.0
      %125 = vmatpush.msra.mxu0 0.0
      %126 = vmatpush.msra.mxu0 0.0
      %127 = vmatpush.msra.mxu0 0.0
      %128 = vmatpush.msra.mxu0 0.0
      %129 = vmatpush.msra.mxu0 0.0
      %130 = vmatpush.msra.mxu0 0.0
      %131 = vmatpush.msra.mxu0 %v108
      %132 = vmatpush.msra.mxu0 %v106
      %133 = vmatpush.msra.mxu0 %v104
      %134 = vmatpush.msra.mxu0 %v102
      %135 = vmatpush.msra.mxu0 %v100
      %136 = vmatpush.msra.mxu0 %v98
      %137 = vmatpush.msra.mxu0 %v96
      %138 = vmatpush.msra.mxu0 %v94
      %139 = vmatmul.f32.gmra.mxu0 %v118
      %v140 = vpop.f32.mrf.mxu0
      %v141 = vadd.f32 %v112, %v140
      %142 = vmatmul.f32.gmra.mxu0 %v121
      %v143 = vpop.f32.mrf.mxu0
      %v144 = vadd.f32 %v112, %v143
      %145 = vdwg.mxu0
      %146 = vmatpush.msra.mxu0 0.0
      %147 = vmatpush.msra.mxu0 0.0
      %148 = vmatpush.msra.mxu0 0.0
      %149 = vmatpush.msra.mxu0 0.0
      %150 = vmatpush.msra.mxu0 0.0
      %151 = vmatpush.msra.mxu0 0.0
      %152 = vmatpush.msra.mxu0 0.0
      %153 = vmatpush.msra.mxu0 0.0
      %154 = vmatpush.msra.mxu0 %v109
      %155 = vmatpush.msra.mxu0 %v107
      %156 = vmatpush.msra.mxu0 %v105
      %157 = vmatpush.msra.mxu0 %v103
      %158 = vmatpush.msra.mxu0 %v101
      %159 = vmatpush.msra.mxu0 %v99
      %160 = vmatpush.msra.mxu0 %v97
      %161 = vmatpush.msra.mxu0 %v95
      %162 = vmatmul.f32.gmra.mxu0 %v118
      %v163 = vpop.f32.mrf.mxu0
      %v164 = vadd.f32 %v113, %v163
      %165 = vmatmul.f32.gmra.mxu0 %v121
      %v166 = vpop.f32.mrf.mxu0
      %v167 = vadd.f32 %v113, %v166
      %168 = vdwg.mxu0
      %v169 = vmax.f32 %v141, 0.0
      %v170 = vmax.f32 %v164, 0.0
      %v171 = vmax.f32 %v144, 0.0
      %v172 = vmax.f32 %v167, 0.0
      %v173 = vld [vmem:[#allocation6] sm:$0xff]
      %v174 = vld [vmem:[#allocation6 + $0x8] sm:$0xff]
      %v175 = vld [vmem:[#allocation6 + $0x10] sm:$0xff]
      %v176 = vld [vmem:[#allocation6 + $0x18] sm:$0xff]
      %v177 = vld [vmem:[#allocation6 + $0x20] sm:$0xff]
      %v178 = vld [vmem:[#allocation6 + $0x28] sm:$0xff]
      %v179 = vld [vmem:[#allocation6 + $0x30] sm:$0xff]
      %v180 = vld [vmem:[#allocation6 + $0x38] sm:$0xff]
      %v181 = vld [vmem:[#allocation6 + $0x40] sm:$0xff]
      %v182 = vld [vmem:[#allocation6 + $0x48] sm:$0xff]
      %v183 = vld [vmem:[#allocation6 + $0x50] sm:$0xff]
      %v184 = vld [vmem:[#allocation6 + $0x58] sm:$0xff]
      %v185 = vld [vmem:[#allocation6 + $0x60] sm:$0xff]
      %v186 = vld [vmem:[#allocation6 + $0x68] sm:$0xff]
      %v187 = vld [vmem:[#allocation6 + $0x70] sm:$0xff]
      %v188 = vld [vmem:[#allocation6 + $0x78] sm:$0xff]
      %v189 = vld [vmem:[#allocation6 + $0x80] sm:$0xff]
      %v190 = vld [vmem:[#allocation6 + $0x88] sm:$0xff]
      %v191 = vld [vmem:[#allocation6 + $0x90] sm:$0xff]
      %v192 = vld [vmem:[#allocation6 + $0x98] sm:$0xff]
      %v193 = vld [vmem:[#allocation6 + $0xa0] sm:$0xff]
      %v194 = vld [vmem:[#allocation6 + $0xa8] sm:$0xff]
      %v195 = vld [vmem:[#allocation6 + $0xb0] sm:$0xff]
      %v196 = vld [vmem:[#allocation6 + $0xb8] sm:$0xff]
      %v197 = vld [vmem:[#allocation6 + $0xc0] sm:$0xff]
      %v198 = vld [vmem:[#allocation6 + $0xc8] sm:$0xff]
      %v199 = vld [vmem:[#allocation6 + $0xd0] sm:$0xff]
      %v200 = vld [vmem:[#allocation6 + $0xd8] sm:$0xff]
      %v201 = vld [vmem:[#allocation6 + $0xe0] sm:$0xff]
      %v202 = vld [vmem:[#allocation6 + $0xe8] sm:$0xff]
      %v203 = vld [vmem:[#allocation6 + $0xf0] sm:$0xff]
      %v204 = vld [vmem:[#allocation6 + $0xf8] sm:$0xff]
      %v205 = vld [vmem:[#allocation6 + $0x100] sm:$0xff]
      %v206 = vld [vmem:[#allocation6 + $0x108] sm:$0xff]
      %v207 = vld [vmem:[#allocation6 + $0x110] sm:$0xff]
      %v208 = vld [vmem:[#allocation6 + $0x118] sm:$0xff]
      %v209 = vld [vmem:[#allocation6 + $0x120] sm:$0xff]
      %v210 = vld [vmem:[#allocation6 + $0x128] sm:$0xff]
      %v211 = vld [vmem:[#allocation6 + $0x130] sm:$0xff]
      %v212 = vld [vmem:[#allocation6 + $0x138] sm:$0xff]
      %v213 = vld [vmem:[#allocation6 + $0x140] sm:$0xff]
      %v214 = vld [vmem:[#allocation6 + $0x148] sm:$0xff]
      %v215 = vld [vmem:[#allocation6 + $0x150] sm:$0xff]
      %v216 = vld [vmem:[#allocation6 + $0x158] sm:$0xff]
      %v217 = vld [vmem:[#allocation6 + $0x160] sm:$0xff]
      %v218 = vld [vmem:[#allocation6 + $0x168] sm:$0xff]
      %v219 = vld [vmem:[#allocation6 + $0x170] sm:$0xff]
      %v220 = vld [vmem:[#allocation6 + $0x178] sm:$0xff]
      %v221 = vld [vmem:[#allocation6 + $0x180] sm:$0xff]
      %v222 = vld [vmem:[#allocation6 + $0x188] sm:$0xff]
      %v223 = vld [vmem:[#allocation6 + $0x190] sm:$0xff]
      %v224 = vld [vmem:[#allocation6 + $0x198] sm:$0xff]
      %v225 = vld [vmem:[#allocation6 + $0x1a0] sm:$0xff]
      %v226 = vld [vmem:[#allocation6 + $0x1a8] sm:$0xff]
      %v227 = vld [vmem:[#allocation6 + $0x1b0] sm:$0xff]
      %v228 = vld [vmem:[#allocation6 + $0x1b8] sm:$0xff]
      %v229 = vld [vmem:[#allocation6 + $0x1c0] sm:$0xff]
      %v230 = vld [vmem:[#allocation6 + $0x1c8] sm:$0xff]
      %v231 = vld [vmem:[#allocation6 + $0x1d0] sm:$0xff]
      %v232 = vld [vmem:[#allocation6 + $0x1d8] sm:$0xff]
      %v233 = vld [vmem:[#allocation6 + $0x1e0] sm:$0xff]
      %v234 = vld [vmem:[#allocation6 + $0x1e8] sm:$0xff]
      %v235 = vld [vmem:[#allocation6 + $0x1f0] sm:$0xff]
      %v236 = vld [vmem:[#allocation6 + $0x1f8] sm:$0xff]
      %v237 = vld [vmem:[%s4] sm:$0x3]
      %v239 = vperm.slane %v237, 0
      %v240 = vperm.slane %v237, 1
      %243 = vmatpush.msra.mxu0 %v203
      %244 = vmatpush.msra.mxu0 %v201
      %245 = vmatpush.msra.mxu0 %v199
      %246 = vmatpush.msra.mxu0 %v197
      %247 = vmatpush.msra.mxu0 %v195
      %248 = vmatpush.msra.mxu0 %v193
      %249 = vmatpush.msra.mxu0 %v191
      %250 = vmatpush.msra.mxu0 %v189
      %251 = vmatpush.msra.mxu0 %v187
      %252 = vmatpush.msra.mxu0 %v185
      %253 = vmatpush.msra.mxu0 %v183
      %254 = vmatpush.msra.mxu0 %v181
      %255 = vmatpush.msra.mxu0 %v179
      %256 = vmatpush.msra.mxu0 %v177
      %257 = vmatpush.msra.mxu0 %v175
      %258 = vmatpush.msra.mxu0 %v173
      %259 = vmatmul.f32.gmra.mxu0 %v169
      %v260 = vpop.f32.mrf.mxu0
      %v261 = vadd.f32 %v239, %v260
      %262 = vmatmul.f32.gmra.mxu0 %v171
      %v263 = vpop.f32.mrf.mxu0
      %v264 = vadd.f32 %v239, %v263
      %265 = vdwg.mxu0
      %266 = vmatpush.msra.mxu0 %v235
      %267 = vmatpush.msra.mxu0 %v233
      %268 = vmatpush.msra.mxu0 %v231
      %269 = vmatpush.msra.mxu0 %v229
      %270 = vmatpush.msra.mxu0 %v227
      %271 = vmatpush.msra.mxu0 %v225
      %272 = vmatpush.msra.mxu0 %v223
      %273 = vmatpush.msra.mxu0 %v221
      %274 = vmatpush.msra.mxu0 %v219
      %275 = vmatpush.msra.mxu0 %v217
      %276 = vmatpush.msra.mxu0 %v215
      %277 = vmatpush.msra.mxu0 %v213
      %278 = vmatpush.msra.mxu0 %v211
      %279 = vmatpush.msra.mxu0 %v209
      %280 = vmatpush.msra.mxu0 %v207
      %281 = vmatpush.msra.mxu0 %v205
      %282 = vmatmul.f32.gmra.mxu0 %v170
      %v283 = vpop.f32.mrf.mxu0
      %v284 = vadd.f32 %v261, %v283
      %285 = vmatmul.f32.gmra.mxu0 %v172
      %v286 = vpop.f32.mrf.mxu0
      %v287 = vadd.f32 %v264, %v286
      %288 = vdwg.mxu0
      %289 = vmatpush.msra.mxu0 %v204
      %290 = vmatpush.msra.mxu0 %v202
      %291 = vmatpush.msra.mxu0 %v200
      %292 = vmatpush.msra.mxu0 %v198
      %293 = vmatpush.msra.mxu0 %v196
      %294 = vmatpush.msra.mxu0 %v194
      %295 = vmatpush.msra.mxu0 %v192
      %296 = vmatpush.msra.mxu0 %v190
      %297 = vmatpush.msra.mxu0 %v188
      %298 = vmatpush.msra.mxu0 %v186
      %299 = vmatpush.msra.mxu0 %v184
      %300 = vmatpush.msra.mxu0 %v182
      %301 = vmatpush.msra.mxu0 %v180
      %302 = vmatpush.msra.mxu0 %v178
      %303 = vmatpush.msra.mxu0 %v176
      %304 = vmatpush.msra.mxu0 %v174
      %305 = vmatmul.f32.gmra.mxu0 %v169
      %v306 = vpop.f32.mrf.mxu0
      %v307 = vadd.f32 %v240, %v306
      %308 = vmatmul.f32.gmra.mxu0 %v171
      %v309 = vpop.f32.mrf.mxu0
      %v310 = vadd.f32 %v240, %v309
      %311 = vdwg.mxu0
      %312 = vmatpush.msra.mxu0 %v236
      %313 = vmatpush.msra.mxu0 %v234
      %314 = vmatpush.msra.mxu0 %v232
      %315 = vmatpush.msra.mxu0 %v230
      %316 = vmatpush.msra.mxu0 %v228
      %317 = vmatpush.msra.mxu0 %v226
      %318 = vmatpush.msra.mxu0 %v224
      %319 = vmatpush.msra.mxu0 %v222
      %320 = vmatpush.msra.mxu0 %v220
      %321 = vmatpush.msra.mxu0 %v218
      %322 = vmatpush.msra.mxu0 %v216
      %323 = vmatpush.msra.mxu0 %v214
      %324 = vmatpush.msra.mxu0 %v212
      %325 = vmatpush.msra.mxu0 %v210
      %326 = vmatpush.msra.mxu0 %v208
      %327 = vmatpush.msra.mxu0 %v206
      %328 = vmatmul.f32.gmra.mxu0 %v170
      %v329 = vpop.f32.mrf.mxu0
      %v330 = vadd.f32 %v307, %v329
      %331 = vmatmul.f32.gmra.mxu0 %v172
      %v332 = vpop.f32.mrf.mxu0
      %v333 = vadd.f32 %v310, %v332
      %334 = vdwg.mxu0
      %v335 = vmax.f32 %v284, 0.0
      %v336 = vmax.f32 %v330, 0.0
      %v337 = vmax.f32 %v287, 0.0
      %v338 = vmax.f32 %v333, 0.0
      %339 = vst [vmem:[#allocation2] sm:$0xff] %v335
      %340 = vst [vmem:[#allocation2 + $0x8] sm:$0xff] %v336
      %341 = vst [vmem:[#allocation2 + $0x10] sm:$0xff] %v337
      %342 = vst [vmem:[#allocation2 + $0x18] sm:$0xff] %v338
    $region45: #{tpu_custom_call.1} parent=1 // pred_fallthru
      _
    %v343 = vld [vmem:[#allocation2] sm:$0xff]
    %v344 = vld [vmem:[#allocation2 + $0x8] sm:$0xff]
    %v345 = vld [vmem:[#allocation2 + $0x10] sm:$0xff]
    %v346 = vld [vmem:[#allocation2 + $0x18] sm:$0xff]
    %v347 = vld [vmem:[#allocation8] sm:$0xff]
    %v348 = vld [vmem:[#allocation8 + $0x8] sm:$0xff]
    %v349 = vld [vmem:[#allocation8 + $0x10] sm:$0xff]
    %v350 = vld [vmem:[#allocation8 + $0x18] sm:$0xff]
    %v351 = vld [vmem:[#allocation8 + $0x20] sm:$0xff]
    %v352 = vld [vmem:[#allocation8 + $0x28] sm:$0xff]
    %v353 = vld [vmem:[#allocation8 + $0x30] sm:$0xff]
    %v354 = vld [vmem:[#allocation8 + $0x38] sm:$0xff]
    %v355 = vld [vmem:[#allocation8 + $0x40] sm:$0xff]
    %v356 = vld [vmem:[#allocation8 + $0x48] sm:$0xff]
    %v357 = vld [vmem:[#allocation8 + $0x50] sm:$0xff]
    %v358 = vld [vmem:[#allocation8 + $0x58] sm:$0xff]
    %v359 = vld [vmem:[#allocation8 + $0x60] sm:$0xff]
    %v360 = vld [vmem:[#allocation8 + $0x68] sm:$0xff]
    %v361 = vld [vmem:[#allocation8 + $0x70] sm:$0xff]
    %v362 = vld [vmem:[#allocation8 + $0x78] sm:$0xff]
    %v363 = vld [vmem:[#allocation8 + $0x80] sm:$0xff]
    %v364 = vld [vmem:[#allocation8 + $0x88] sm:$0xff]
    %v365 = vld [vmem:[#allocation8 + $0x90] sm:$0xff]
    %v366 = vld [vmem:[#allocation8 + $0x98] sm:$0xff]
    %v367 = vld [vmem:[#allocation8 + $0xa0] sm:$0xff]
    %v368 = vld [vmem:[#allocation8 + $0xa8] sm:$0xff]
    %v369 = vld [vmem:[#allocation8 + $0xb0] sm:$0xff]
    %v370 = vld [vmem:[#allocation8 + $0xb8] sm:$0xff]
    %v371 = vld [vmem:[#allocation8 + $0xc0] sm:$0xff]
    %v372 = vld [vmem:[#allocation8 + $0xc8] sm:$0xff]
    %v373 = vld [vmem:[#allocation8 + $0xd0] sm:$0xff]
    %v374 = vld [vmem:[#allocation8 + $0xd8] sm:$0xff]
    %v375 = vld [vmem:[#allocation8 + $0xe0] sm:$0xff]
    %v376 = vld [vmem:[#allocation8 + $0xe8] sm:$0xff]
    %v377 = vld [vmem:[#allocation8 + $0xf0] sm:$0xff]
    %v378 = vld [vmem:[#allocation8 + $0xf8] sm:$0xff]
    %v379 = vld [vmem:[%s6] sm:$0x1]
    %v381 = vperm.slane %v379, 0
    %383 = vmatpush.msra.mxu0 %v362
    %384 = vmatpush.msra.mxu0 %v361
    %385 = vmatpush.msra.mxu0 %v360
    %386 = vmatpush.msra.mxu0 %v359
    %387 = vmatpush.msra.mxu0 %v358
    %388 = vmatpush.msra.mxu0 %v357
    %389 = vmatpush.msra.mxu0 %v356
    %390 = vmatpush.msra.mxu0 %v355
    %391 = vmatpush.msra.mxu0 %v354
    %392 = vmatpush.msra.mxu0 %v353
    %393 = vmatpush.msra.mxu0 %v352
    %394 = vmatpush.msra.mxu0 %v351
    %395 = vmatpush.msra.mxu0 %v350
    %396 = vmatpush.msra.mxu0 %v349
    %397 = vmatpush.msra.mxu0 %v348
    %398 = vmatpush.msra.mxu0 %v347
    %399 = vmatmul.f32.gmra.mxu0 %v343
    %v400 = vpop.f32.mrf.mxu0
    %v401 = vadd.f32 %v381, %v400
    %402 = vmatmul.f32.gmra.mxu0 %v345
    %v403 = vpop.f32.mrf.mxu0
    %v404 = vadd.f32 %v381, %v403
    %405 = vdwg.mxu0
    %406 = vmatpush.msra.mxu0 %v378
    %407 = vmatpush.msra.mxu0 %v377
    %408 = vmatpush.msra.mxu0 %v376
    %409 = vmatpush.msra.mxu0 %v375
    %410 = vmatpush.msra.mxu0 %v374
    %411 = vmatpush.msra.mxu0 %v373
    %412 = vmatpush.msra.mxu0 %v372
    %413 = vmatpush.msra.mxu0 %v371
    %414 = vmatpush.msra.mxu0 %v370
    %415 = vmatpush.msra.mxu0 %v369
    %416 = vmatpush.msra.mxu0 %v368
    %417 = vmatpush.msra.mxu0 %v367
    %418 = vmatpush.msra.mxu0 %v366
    %419 = vmatpush.msra.mxu0 %v365
    %420 = vmatpush.msra.mxu0 %v364
    %421 = vmatpush.msra.mxu0 %v363
    %422 = vmatmul.f32.gmra.mxu0 %v344
    %v423 = vpop.f32.mrf.mxu0
    %v424 = vadd.f32 %v401, %v423
    %425 = vmatmul.f32.gmra.mxu0 %v346
    %v426 = vpop.f32.mrf.mxu0
    %v427 = vadd.f32 %v404, %v426
    %428 = vdwg.mxu0
    %429 = vst [vmem:[#allocation9] sm:$0xff] %v424
    %430 = vst [vmem:[#allocation9 + $0x8] sm:$0xff] %v427
    // Predicated region
    $region46: #{tpu_custom_call.1} parent=1 // pred_check
      _
    $region47: #{tpu_custom_call.1} parent=1 // pred_check_branch
      %432 = sbr.rel (0) target = $region49
    $region48: #{tpu_custom_call.1} parent=1 // pred_region
      %434 = vsyncadd [#allocation5], 0
      %s435 = sshll.u32 [#allocation9], 4
      %s436 = int_to_ptr.vmem [resolvable:$true] %s435
      %s437 = sshll.u32 %s7, 4
      %s438 = int_to_ptr.hbm [resolvable:$true] %s437
      %443 = dma.vmem_to_hbm [thread:$0]  %s436, 256, %s438, [#allocation5], 128, 128, 8
    $region49: #{tpu_custom_call.1} parent=1 // pred_fallthru
      _
    // Predicated region
    $region50: #{tpu_custom_call.1} parent=1 // pred_check
      _
    $region51: #{tpu_custom_call.1} parent=1 // pred_check_branch
      %445 = sbr.rel (0) target = $region53
    $region52: #{tpu_custom_call.1} parent=1 // pred_region
      %447 = dma.done [#allocation5], 256
    $region53: #{tpu_custom_call.1} parent=1 // pred_fallthru
      _
    %448 = vsyncpa [#allocation4], 1
    %449 = vsyncpa [#allocation7], 1
    %450 = vsyncpa [#allocation5], 1

</llo_original>
